<compile_context>
chip_gen: v7x
topology: tpu7x:2x2x1
jax: 0.10.0
libtpu: 0.0.40
codegen_flags: <defaults>
</compile_context>

<pallas_src>
import jax
import jax.numpy as jnp
from jax.experimental import pallas as pl
from jax.experimental.pallas import tpu as pltpu


def _critic_kernel(state_ref, action_ref,
                   w1_ref, w2p_ref, w2a_ref, w3_ref,
                   pack512_ref, packb_ref,
                   out_ref):
    # ---- unpack consolidated small params (f32) ---------------------------
    pk = pack512_ref[...]                          # [3, 512]: b1, gamma, beta
    b1, gamma, beta = pk[0:1, :], pk[1:2, :], pk[2:3, :]
    pb = packb_ref[...]                            # [2, >=256]: b2, b3(padded)
    b2 = pb[0:1, :w2p_ref.shape[1]]
    b3 = pb[1:2, :out_ref.shape[1]]

    # ---- fc_phi1 + relu (MXU, bf16 operands, f32 accumulation) ------------
    h = jnp.dot(state_ref[...], w1_ref[...],
                preferred_element_type=jnp.float32) + b1
    h = jnp.maximum(h, 0.0)                        # f32 VPU

    # ---- BatchNorm1d (training mode): one-pass stats, folded scale/shift --
    inv_n = 1.0 / h.shape[0]
    s = jnp.sum(h, axis=0, keepdims=True)          # XLU reduce
    s2 = jnp.sum(h * h, axis=0, keepdims=True)     # XLU reduce (back-to-back)
    mu = s * inv_n
    var = jnp.maximum(s2 * inv_n - mu * mu, 0.0)   # biased var, clamp cancellation
    inv_std = jax.lax.rsqrt(var + 1e-5)            # EUP
    scale = inv_std * gamma                        # [1, 512] f32
    shift = beta - mu * scale                      # [1, 512] f32
    # single wide normalize pass fused with the bf16 pack for the next matmul
    p = (h * scale + shift).astype(w2p_ref.dtype)

    # ---- fc1_c on concat([p, action]) + relu: split matmul, both on MXU ----
    c = jnp.dot(p, w2p_ref[...], preferred_element_type=jnp.float32)
    c = c + jnp.dot(action_ref[...], w2a_ref[...],
                    preferred_element_type=jnp.float32)
    c = jnp.maximum(c + b2, 0.0)

    # ---- fc_critic: lane-dense [B, 128*k] store (unmasked vst) -------------
    out_ref[...] = (jnp.dot(c.astype(w3_ref.dtype), w3_ref[...],
                            preferred_element_type=jnp.float32) + b3)


def prepare_params(params, *, use_bf16=True):
    """One-time weight preprocessing (cast / split / pad / pack). Call once and
    reuse the result across forward calls so no per-call weight traffic is rebuilt."""
    w1 = params["w_phi1"]        # [state_size, 512]
    b1 = params["b_phi1"]        # [1, 512]
    gamma = params["bn_gamma"]   # [1, 512]
    beta = params["bn_beta"]     # [1, 512]
    w2 = params["w_fc1c"]        # [512 + A, 256]
    b2 = params["b_fc1c"]        # [1, 256]
    w3 = params["w_critic"]      # [256, A]
    b3 = params["b_critic"]      # [1, A]

    base_units = w1.shape[1]
    fc1_units = w2.shape[1]
    A = w3.shape[1]
    mm_dtype = jnp.bfloat16 if use_bf16 else jnp.float32

    # Split the concat matmul column-wise.
    w2p = w2[:base_units, :]                           # [512, 256]
    w2a = w2[base_units:, :]                           # [A, 256]

    # Pad the action contraction dim and the final output to 128 lanes (aligned MXU
    # shapes + unmasked vst).  Zero padding is exact.
    a_pad = 128 * pl.cdiv(A, 128)
    n_pad = 128 * pl.cdiv(A, 128)
    w2a_pad = jnp.zeros((a_pad, fc1_units), w2.dtype).at[:A, :].set(w2a)
    w3_pad = jnp.zeros((w3.shape[0], n_pad), w3.dtype).at[:, :A].set(w3)

    # Consolidate the tiny [1,*] vectors into two packed inputs.
    pack512 = jnp.concatenate([b1, gamma, beta], axis=0).astype(jnp.float32)  # [3,512]
    width_b = max(fc1_units, n_pad)
    packb = jnp.zeros((2, width_b), jnp.float32)
    packb = packb.at[0, :fc1_units].set(b2[0])
    packb = packb.at[1, :A].set(b3[0])

    return {
        "w1": w1.astype(mm_dtype),
        "w2p": w2p.astype(mm_dtype),
        "w2a": w2a_pad.astype(mm_dtype),
        "w3": w3_pad.astype(mm_dtype),
        "pack512": pack512,
        "packb": packb,
    }


def critic_forward(state, action, prepared):
    """state: [B, state_size], action: [B, action_size] -> [B, action_size]."""
    B = state.shape[0]
    A = action.shape[1]
    # Training-mode BatchNorm uses batch statistics: the batch must NOT be zero-padded
    # (it would corrupt the stats), so require a sublane-aligned batch instead.
    assert B % 8 == 0, "batch size must be a multiple of 8 (sublane tiling); do not zero-pad the batch"

    w1, w2p, w2a, w3 = prepared["w1"], prepared["w2p"], prepared["w2a"], prepared["w3"]
    pack512, packb = prepared["pack512"], prepared["packb"]
    mm_dtype = w1.dtype
    a_pad = w2a.shape[0]
    n_pad = w3.shape[1]

    # Per-call activation prep only (cheap, fuses under jit).
    state_mm = state.astype(mm_dtype)
    action_mm = jnp.zeros((B, a_pad), mm_dtype).at[:, :A].set(action.astype(mm_dtype))

    inputs = (state_mm, action_mm, w1, w2p, w2a, w3, pack512, packb)
    full = lambda a: pl.BlockSpec(a.shape, lambda: (0,) * a.ndim)

    out_pad = pl.pallas_call(
        _critic_kernel,
        out_shape=jax.ShapeDtypeStruct((B, n_pad), jnp.float32),
        grid=(),
        in_specs=[full(a) for a in inputs],
        out_specs=pl.BlockSpec((B, n_pad), lambda: (0, 0)),
        compiler_params=pltpu.CompilerParams(vmem_limit_bytes=8 * 1024 * 1024),
    )(*inputs)
    return out_pad[:, :A]


def init_params(key, state_size, action_size, fc1_units=256, base_units=512):
    """Deterministic init mirroring nn.Linear default U(-1/sqrt(fan_in), +)."""
    ks = jax.random.split(key, 6)

    def linear(kw, kb, fan_in, fan_out):
        bound = 1.0 / jnp.sqrt(fan_in)
        w = jax.random.uniform(kw, (fan_in, fan_out), jnp.float32, -bound, bound)
        b = jax.random.uniform(kb, (1, fan_out), jnp.float32, -bound, bound)
        return w, b

    w1, b1 = linear(ks[0], ks[1], state_size, base_units)
    w2, b2 = linear(ks[2], ks[3], base_units + action_size, fc1_units)
    w3, b3 = linear(ks[4], ks[5], fc1_units, action_size)
    return {
        "w_phi1": w1, "b_phi1": b1,
        "bn_gamma": jnp.ones((1, base_units), jnp.float32),
        "bn_beta": jnp.zeros((1, base_units), jnp.float32),
        "w_fc1c": w2, "b_fc1c": b2,
        "w_critic": w3, "b_critic": b3,
    }


def _reference_forward(state, action, params, *, use_bf16=False):
    """Plain-JAX reference. With use_bf16, mirrors the kernel's matmul precision
    (bf16 operands, f32 accumulation); elementwise/BN math stays f32."""
    mm = (lambda x: x.astype(jnp.bfloat16)) if use_bf16 else (lambda x: x)
    w1, b1 = params["w_phi1"], params["b_phi1"]
    base = w1.shape[1]
    w2p = params["w_fc1c"][:base, :]
    w2a = params["w_fc1c"][base:, :]

    h = jnp.maximum(jnp.dot(mm(state), mm(w1),
                            preferred_element_type=jnp.float32) + b1, 0.0)
    mu = jnp.mean(h, axis=0, keepdims=True)
    var = jnp.mean((h - mu) ** 2, axis=0, keepdims=True)
    p = (h - mu) * jax.lax.rsqrt(var + 1e-5) * params["bn_gamma"] + params["bn_beta"]
    c = (jnp.dot(mm(p), mm(w2p), preferred_element_type=jnp.float32)
         + jnp.dot(mm(action), mm(w2a), preferred_element_type=jnp.float32)
         + params["b_fc1c"])
    c = jnp.maximum(c, 0.0)
    return (jnp.dot(mm(c), mm(params["w_critic"]),
                    preferred_element_type=jnp.float32) + params["b_critic"])


if __name__ == "__main__":
    # small shapes consistent with the module (B must be a multiple of 8 for sublanes)
    B, state_size, action_size = 8, 16, 4

    key = jax.random.PRNGKey(0)
    k_state, k_action, k_params = jax.random.split(key, 3)

    state = jax.random.normal(k_state, (B, state_size), jnp.float32)
    action = jax.random.normal(k_action, (B, action_size), jnp.float32)
    params = init_params(k_params, state_size, action_size)

    fwd = jax.jit(critic_forward)

    # 1) f32 path: exact-semantics check against the plain-JAX reference.
    prep_f32 = prepare_params(params, use_bf16=False)       # one-time prep
    out_f32 = jax.block_until_ready(fwd(state, action, prep_f32))
    ref_f32 = _reference_forward(state, action, params, use_bf16=False)
    assert out_f32.shape == (B, action_size)
    assert jnp.allclose(out_f32, ref_f32, atol=1e-3, rtol=1e-3)

    # 2) bf16-matmul path (default): check against a precision-mirrored reference.
    prep_bf16 = prepare_params(params, use_bf16=True)        # one-time prep
    out_bf16 = jax.block_until_ready(fwd(state, action, prep_bf16))
    ref_bf16 = _reference_forward(state, action, params, use_bf16=True)
    assert out_bf16.shape == (B, action_size)
    assert jnp.allclose(out_bf16, ref_bf16, atol=1e-2, rtol=1e-2)

    print("KERNEL_OK")
</pallas_src>

<mosaic_0001>
module attributes {stable_mosaic.version = 11 : i64} {
  func.func @_critic_kernel(%arg0: memref<8x16xf32, #tpu.memory_space<vmem>>, %arg1: memref<8x128xf32, #tpu.memory_space<vmem>>, %arg2: memref<16x512xf32, #tpu.memory_space<vmem>>, %arg3: memref<512x256xf32, #tpu.memory_space<vmem>>, %arg4: memref<128x256xf32, #tpu.memory_space<vmem>>, %arg5: memref<256x128xf32, #tpu.memory_space<vmem>>, %arg6: memref<3x512xf32, #tpu.memory_space<vmem>>, %arg7: memref<2x256xf32, #tpu.memory_space<vmem>>, %arg8: memref<8x128xf32, #tpu.memory_space<vmem>>) attributes {dimension_semantics = [], scalar_prefetch = 0 : i64, scratch_operands = 0 : i64, tpu.core_type = #tpu.core_type<tc>} {
    %c0 = arith.constant 0 : index
    %c0_0 = arith.constant 0 : index
    %0 = vector.load %arg6[%c0, %c0_0] : memref<3x512xf32, #tpu.memory_space<vmem>>, vector<3x512xf32>
    %1 = vector.extract_strided_slice %0 {offsets = [0, 0], sizes = [1, 512], strides = [1, 1]} : vector<3x512xf32> to vector<1x512xf32>
    %2 = vector.extract_strided_slice %0 {offsets = [1, 0], sizes = [1, 512], strides = [1, 1]} : vector<3x512xf32> to vector<1x512xf32>
    %3 = vector.extract_strided_slice %0 {offsets = [2, 0], sizes = [1, 512], strides = [1, 1]} : vector<3x512xf32> to vector<1x512xf32>
    %c0_1 = arith.constant 0 : index
    %c0_2 = arith.constant 0 : index
    %4 = vector.load %arg7[%c0_1, %c0_2] : memref<2x256xf32, #tpu.memory_space<vmem>>, vector<2x256xf32>
    %5 = vector.extract_strided_slice %4 {offsets = [0, 0], sizes = [1, 256], strides = [1, 1]} : vector<2x256xf32> to vector<1x256xf32>
    %6 = vector.extract_strided_slice %4 {offsets = [1, 0], sizes = [1, 128], strides = [1, 1]} : vector<2x256xf32> to vector<1x128xf32>
    %c0_3 = arith.constant 0 : index
    %c0_4 = arith.constant 0 : index
    %7 = vector.load %arg0[%c0_3, %c0_4] : memref<8x16xf32, #tpu.memory_space<vmem>>, vector<8x16xf32>
    %c0_5 = arith.constant 0 : index
    %c0_6 = arith.constant 0 : index
    %8 = vector.load %arg2[%c0_5, %c0_6] : memref<16x512xf32, #tpu.memory_space<vmem>>, vector<16x512xf32>
    %cst = arith.constant dense<0.000000e+00> : vector<8x512xf32>
    %9 = tpu.matmul %7, %8, %cst {dimension_numbers = #tpu.dot_dimension_numbers<[1], [0], [0], [1], [0, 0, 1, 1], [], []>} : vector<8x16xf32>, vector<16x512xf32>, vector<8x512xf32> -> vector<8x512xf32>
    %10 = vector.broadcast %1 : vector<1x512xf32> to vector<8x512xf32>
    %11 = arith.addf %9, %10 : vector<8x512xf32>
    %cst_7 = arith.constant 0.000000e+00 : f32
    %12 = vector.broadcast %cst_7 : f32 to vector<8x512xf32>
    %13 = arith.maximumf %11, %12 : vector<8x512xf32>
    %cst_8 = arith.constant dense<0.000000e+00> : vector<512xf32>
    %14 = vector.multi_reduction <add>, %13, %cst_8 [0] : vector<8x512xf32> to vector<512xf32>
    %15 = vector.shape_cast %14 : vector<512xf32> to vector<1x512xf32>
    %16 = arith.mulf %13, %13 : vector<8x512xf32>
    %cst_9 = arith.constant dense<0.000000e+00> : vector<512xf32>
    %17 = vector.multi_reduction <add>, %16, %cst_9 [0] : vector<8x512xf32> to vector<512xf32>
    %18 = vector.shape_cast %17 : vector<512xf32> to vector<1x512xf32>
    %cst_10 = arith.constant 1.250000e-01 : f32
    %19 = vector.broadcast %cst_10 : f32 to vector<1x512xf32>
    %20 = arith.mulf %15, %19 : vector<1x512xf32>
    %cst_11 = arith.constant 1.250000e-01 : f32
    %21 = vector.broadcast %cst_11 : f32 to vector<1x512xf32>
    %22 = arith.mulf %18, %21 : vector<1x512xf32>
    %23 = arith.mulf %20, %20 : vector<1x512xf32>
    %24 = arith.subf %22, %23 : vector<1x512xf32>
    %cst_12 = arith.constant 0.000000e+00 : f32
    %25 = vector.broadcast %cst_12 : f32 to vector<1x512xf32>
    %26 = arith.maximumf %24, %25 : vector<1x512xf32>
    %cst_13 = arith.constant 9.99999974E-6 : f32
    %27 = vector.broadcast %cst_13 : f32 to vector<1x512xf32>
    %28 = arith.addf %26, %27 : vector<1x512xf32>
    %29 = math.rsqrt %28 : vector<1x512xf32>
    %30 = arith.mulf %29, %2 : vector<1x512xf32>
    %31 = arith.mulf %20, %30 : vector<1x512xf32>
    %32 = arith.subf %3, %31 : vector<1x512xf32>
    %33 = vector.broadcast %30 : vector<1x512xf32> to vector<8x512xf32>
    %34 = arith.mulf %13, %33 : vector<8x512xf32>
    %35 = vector.broadcast %32 : vector<1x512xf32> to vector<8x512xf32>
    %36 = arith.addf %34, %35 : vector<8x512xf32>
    %c0_14 = arith.constant 0 : index
    %c0_15 = arith.constant 0 : index
    %37 = vector.load %arg3[%c0_14, %c0_15] : memref<512x256xf32, #tpu.memory_space<vmem>>, vector<512x256xf32>
    %cst_16 = arith.constant dense<0.000000e+00> : vector<8x256xf32>
    %38 = tpu.matmul %36, %37, %cst_16 {dimension_numbers = #tpu.dot_dimension_numbers<[1], [0], [0], [1], [0, 0, 1, 1], [], []>} : vector<8x512xf32>, vector<512x256xf32>, vector<8x256xf32> -> vector<8x256xf32>
    %c0_17 = arith.constant 0 : index
    %c0_18 = arith.constant 0 : index
    %39 = vector.load %arg1[%c0_17, %c0_18] : memref<8x128xf32, #tpu.memory_space<vmem>>, vector<8x128xf32>
    %c0_19 = arith.constant 0 : index
    %c0_20 = arith.constant 0 : index
    %40 = vector.load %arg4[%c0_19, %c0_20] : memref<128x256xf32, #tpu.memory_space<vmem>>, vector<128x256xf32>
    %cst_21 = arith.constant dense<0.000000e+00> : vector<8x256xf32>
    %41 = tpu.matmul %39, %40, %cst_21 {dimension_numbers = #tpu.dot_dimension_numbers<[1], [0], [0], [1], [0, 0, 1, 1], [], []>} : vector<8x128xf32>, vector<128x256xf32>, vector<8x256xf32> -> vector<8x256xf32>
    %42 = arith.addf %38, %41 : vector<8x256xf32>
    %43 = vector.broadcast %5 : vector<1x256xf32> to vector<8x256xf32>
    %44 = arith.addf %42, %43 : vector<8x256xf32>
    %cst_22 = arith.constant 0.000000e+00 : f32
    %45 = vector.broadcast %cst_22 : f32 to vector<8x256xf32>
    %46 = arith.maximumf %44, %45 : vector<8x256xf32>
    %c0_23 = arith.constant 0 : index
    %c0_24 = arith.constant 0 : index
    %47 = vector.load %arg5[%c0_23, %c0_24] : memref<256x128xf32, #tpu.memory_space<vmem>>, vector<256x128xf32>
    %cst_25 = arith.constant dense<0.000000e+00> : vector<8x128xf32>
    %48 = tpu.matmul %46, %47, %cst_25 {dimension_numbers = #tpu.dot_dimension_numbers<[1], [0], [0], [1], [0, 0, 1, 1], [], []>} : vector<8x256xf32>, vector<256x128xf32>, vector<8x128xf32> -> vector<8x128xf32>
    %49 = vector.broadcast %6 : vector<1x128xf32> to vector<8x128xf32>
    %50 = arith.addf %48, %49 : vector<8x128xf32>
    %c0_26 = arith.constant 0 : index
    %c0_27 = arith.constant 0 : index
    %51 = vector.load %arg8[%c0_26, %c0_27] : memref<8x128xf32, #tpu.memory_space<vmem>>, vector<8x128xf32>
    tpu.vector_store %arg8[%c0_26, %c0_27], %50 {strides = array<i32>} : memref<8x128xf32, #tpu.memory_space<vmem>>, vector<8x128xf32>,
    return
  }
}

</mosaic_0001>

<llo_original>
// kernel: critic_forward.1
$region0: #{critic_forward.1}
  #allocation0 [shape = 'u32[]', space=smem, size = 0x4, offset = 0x4, fixed_abs, tag = 'smem constant byte address 0x4 - core index']
  #allocation1 [shape = 'u32[144,128]{1,0:T(1,128)}', space=vmem, size = 0x12000, scoped, tag = 'internal scratch']
  %s0 = inlined_call_operand.hbm [shape: f32[8,16], index: 0, kind: input, shape index: {}]
  %s1 = inlined_call_operand.vmem [shape: f32[8,128], index: 1, kind: input, shape index: {}]
  %s2 = inlined_call_operand.vmem [shape: f32[16,512], index: 2, kind: input, shape index: {}]
  %s3 = inlined_call_operand.hbm [shape: f32[512,256], index: 3, kind: input, shape index: {}]
  %s4 = inlined_call_operand.hbm [shape: f32[128,256], index: 4, kind: input, shape index: {}]
  %s5 = inlined_call_operand.hbm [shape: f32[256,128], index: 5, kind: input, shape index: {}]
  %s6 = inlined_call_operand.hbm [shape: f32[3,512], index: 6, kind: input, shape index: {}]
  %s7 = inlined_call_operand.hbm [shape: f32[2,256], index: 7, kind: input, shape index: {}]
  %s8 = inlined_call_operand.vmem [shape: f32[8,128], index: 8, kind: output, shape index: {}]
  %s9 = sld [smem:[#allocation0]]
  $region66: #{critic_forward.1} parent=0
    _
  %s11 = ssub.s32 1, %s9
  %s12 = scalar_select 0, %s11, %s9
  $region1: #{critic_forward.1} parent=0
    #allocation2 [shape = 'u8[4096]{0}', space=vmem, size = 0x1000, scoped, tag = 'input window, operand 0, single buffered']
    #allocation3 [shape = 's32[1]{0}', space=sflag, size = 0x4, scoped, tag = 'scoped memory for critic_forward.1']
    #allocation4 [shape = 'u8[524288]{0}', space=vmem, size = 0x80000, scoped, tag = 'input window, operand 3, single buffered']
    #allocation5 [shape = 's32[1]{0}', space=sflag, size = 0x4, scoped, tag = 'scoped memory for critic_forward.1']
    #allocation6 [shape = 'u8[131072]{0}', space=vmem, size = 0x20000, scoped, tag = 'input window, operand 4, single buffered']
    #allocation7 [shape = 'u8[131072]{0}', space=vmem, size = 0x20000, scoped, tag = 'input window, operand 5, single buffered']
    #allocation8 [shape = 's32[1]{0}', space=sflag, size = 0x4, scoped, tag = 'scoped memory for critic_forward.1']
    #allocation9 [shape = 'u8[8192]{0}', space=vmem, size = 0x2000, scoped, tag = 'input window, operand 6, single buffered']
    #allocation10 [shape = 'u8[2048]{0}', space=vmem, size = 0x800, scoped, tag = 'input window, operand 7, single buffered']
    #allocation11 [shape = 's32[1]{0}', space=sflag, size = 0x4, scoped, tag = 'scoped memory for critic_forward.1']
    %13 = vsyncpa [#allocation3], 0
    %14 = vsyncpa [#allocation5], 0
    %15 = vsyncpa [#allocation8], 0
    %16 = vsyncpa [#allocation11], 0
    // Predicated region
    $region2: #{critic_forward.1} parent=1 // pred_check
      _
    $region3: #{critic_forward.1} parent=1 // pred_check_branch
      %18 = sbr.rel (0) target = $region5
    $region4: #{critic_forward.1} parent=1 // pred_region
      %s20 = ssub.s32 128, 128
      %21 = vsyncadd [#allocation3], %s20
      %s23 = sshll.u32 [#allocation2], 4
      %s24 = int_to_ptr.vmem [resolvable:$true] %s23
      %26 = dma.hbm_to_vmem [thread:$0]  %s0, 128, %s24, [#allocation3]
    $region5: #{critic_forward.1} parent=1 // pred_fallthru
      _
    // Predicated region
    $region6: #{critic_forward.1} parent=1 // pred_check
      _
    $region7: #{critic_forward.1} parent=1 // pred_check_branch
      %28 = sbr.rel (0) target = $region9
    $region8: #{critic_forward.1} parent=1 // pred_region
      _
    $region9: #{critic_forward.1} parent=1 // pred_fallthru
      _
    // Predicated region
    $region10: #{critic_forward.1} parent=1 // pred_check
      _
    $region11: #{critic_forward.1} parent=1 // pred_check_branch
      %30 = sbr.rel (0) target = $region13
    $region12: #{critic_forward.1} parent=1 // pred_region
      _
    $region13: #{critic_forward.1} parent=1 // pred_fallthru
      _
    // Predicated region
    $region14: #{critic_forward.1} parent=1 // pred_check
      _
    $region15: #{critic_forward.1} parent=1 // pred_check_branch
      %32 = sbr.rel (0) target = $region17
    $region16: #{critic_forward.1} parent=1 // pred_region
      %s34 = ssub.s32 16384, 16384
      %35 = vsyncadd [#allocation5], %s34
      %s36 = sshll.u32 [#allocation4], 4
      %s37 = int_to_ptr.vmem [resolvable:$true] %s36
      %42 = dma.hbm_to_vmem [thread:$0]  %s3, 16384, %s37, [#allocation5], 256, 256, 16
    $region17: #{critic_forward.1} parent=1 // pred_fallthru
      _
    // Predicated region
    $region18: #{critic_forward.1} parent=1 // pred_check
      _
    $region19: #{critic_forward.1} parent=1 // pred_check_branch
      %44 = sbr.rel (0) target = $region21
    $region20: #{critic_forward.1} parent=1 // pred_region
      %s46 = ssub.s32 4096, 4096
      %47 = vsyncadd [#allocation5], %s46
      %s48 = sshll.u32 [#allocation6], 4
      %s49 = int_to_ptr.vmem [resolvable:$true] %s48
      %54 = dma.hbm_to_vmem [thread:$0]  %s4, 4096, %s49, [#allocation5], 256, 256, 16
    $region21: #{critic_forward.1} parent=1 // pred_fallthru
      _
    // Predicated region
    $region22: #{critic_forward.1} parent=1 // pred_check
      _
    $region23: #{critic_forward.1} parent=1 // pred_check_branch
      %56 = sbr.rel (0) target = $region25
    $region24: #{critic_forward.1} parent=1 // pred_region
      %s58 = ssub.s32 4096, 4096
      %59 = vsyncadd [#allocation8], %s58
      %s60 = sshll.u32 [#allocation7], 4
      %s61 = int_to_ptr.vmem [resolvable:$true] %s60
      %66 = dma.hbm_to_vmem [thread:$0]  %s5, 4096, %s61, [#allocation8], 128, 128, 8
    $region25: #{critic_forward.1} parent=1 // pred_fallthru
      _
    // Predicated region
    $region26: #{critic_forward.1} parent=1 // pred_check
      _
    $region27: #{critic_forward.1} parent=1 // pred_check_branch
      %68 = sbr.rel (0) target = $region29
    $region28: #{critic_forward.1} parent=1 // pred_region
      %s70 = ssub.s32 256, 256
      %71 = vsyncadd [#allocation8], %s70
      %s73 = sshll.u32 [#allocation9], 4
      %s74 = int_to_ptr.vmem [resolvable:$true] %s73
      %76 = dma.hbm_to_vmem [thread:$0]  %s6, 256, %s74, [#allocation8]
    $region29: #{critic_forward.1} parent=1 // pred_fallthru
      _
    // Predicated region
    $region30: #{critic_forward.1} parent=1 // pred_check
      _
    $region31: #{critic_forward.1} parent=1 // pred_check_branch
      %78 = sbr.rel (0) target = $region33
    $region32: #{critic_forward.1} parent=1 // pred_region
      %s80 = ssub.s32 64, 64
      %81 = vsyncadd [#allocation11], %s80
      %s83 = sshll.u32 [#allocation10], 4
      %s84 = int_to_ptr.vmem [resolvable:$true] %s83
      %86 = dma.hbm_to_vmem [thread:$0]  %s7, 64, %s84, [#allocation11]
    $region33: #{critic_forward.1} parent=1 // pred_fallthru
      _
    // Predicated region
    $region34: #{critic_forward.1} parent=1 // pred_check
      _
    $region35: #{critic_forward.1} parent=1 // pred_check_branch
      %88 = sbr.rel (0) target = $region37
    $region36: #{critic_forward.1} parent=1 // pred_region
      %89 = dma.done [#allocation3], 128
    $region37: #{critic_forward.1} parent=1 // pred_fallthru
      _
    // Predicated region
    $region38: #{critic_forward.1} parent=1 // pred_check
      _
    $region39: #{critic_forward.1} parent=1 // pred_check_branch
      %91 = sbr.rel (0) target = $region41
    $region40: #{critic_forward.1} parent=1 // pred_region
      %92 = dma.done [#allocation5], 16384
    $region41: #{critic_forward.1} parent=1 // pred_fallthru
      _
    // Predicated region
    $region42: #{critic_forward.1} parent=1 // pred_check
      _
    $region43: #{critic_forward.1} parent=1 // pred_check_branch
      %94 = sbr.rel (0) target = $region45
    $region44: #{critic_forward.1} parent=1 // pred_region
      %95 = dma.done [#allocation5], 4096
    $region45: #{critic_forward.1} parent=1 // pred_fallthru
      _
    // Predicated region
    $region46: #{critic_forward.1} parent=1 // pred_check
      _
    $region47: #{critic_forward.1} parent=1 // pred_check_branch
      %97 = sbr.rel (0) target = $region49
    $region48: #{critic_forward.1} parent=1 // pred_region
      %98 = dma.done [#allocation8], 4096
    $region49: #{critic_forward.1} parent=1 // pred_fallthru
      _
    // Predicated region
    $region50: #{critic_forward.1} parent=1 // pred_check
      _
    $region51: #{critic_forward.1} parent=1 // pred_check_branch
      %100 = sbr.rel (0) target = $region53
    $region52: #{critic_forward.1} parent=1 // pred_region
      %101 = dma.done [#allocation8], 256
    $region53: #{critic_forward.1} parent=1 // pred_fallthru
      _
    // Predicated region
    $region54: #{critic_forward.1} parent=1 // pred_check
      _
    $region55: #{critic_forward.1} parent=1 // pred_check_branch
      %103 = sbr.rel (0) target = $region57
    $region56: #{critic_forward.1} parent=1 // pred_region
      %104 = dma.done [#allocation11], 64
    $region57: #{critic_forward.1} parent=1 // pred_fallthru
      _
    %v105 = vld [vmem:[#allocation9] sm:$0x77]
    %v106 = vld [vmem:[#allocation9 + $0x8] sm:$0x77]
    %v107 = vld [vmem:[#allocation10] sm:$0xf]
    %v108 = vld [vmem:[#allocation2] sm:$0xff]
    %v109 = vld [vmem:[%s2] sm:$0xff]
    %v110 = vld [vmem:[%s2 + $0x8] sm:$0xff]
    %v111 = vld [vmem:[%s2 + $0x10] sm:$0xff]
    %v112 = vld [vmem:[%s2 + $0x18] sm:$0xff]
    %v113 = vld [vmem:[%s2 + $0x20] sm:$0xff]
    %v114 = vld [vmem:[%s2 + $0x28] sm:$0xff]
    %v115 = vld [vmem:[%s2 + $0x30] sm:$0xff]
    %v116 = vld [vmem:[%s2 + $0x38] sm:$0xff]
    %v119 = vlaneseq
    %v120 = vshrl.u32 %v119, 7
    %v121 = vsub.s32 0, %v120
    %v122 = vrot.slane %v105, %v121
    %v123 = vlaneseq
    %v124 = vshrl.u32 %v123, 7
    %v125 = vsub.s32 4, %v124
    %v126 = vrot.slane %v105, %v125
    %v127 = vlaneseq
    %v128 = vshrl.u32 %v127, 7
    %v129 = vsub.s32 0, %v128
    %v130 = vrot.slane %v106, %v129
    %v131 = vlaneseq
    %v132 = vshrl.u32 %v131, 7
    %v133 = vsub.s32 4, %v132
    %v134 = vrot.slane %v106, %v133
    %v139 = vlaneseq
    %v140 = vshrl.u32 %v139, 7
    %v141 = vsub.s32 0, %v140
    %v142 = vrot.slane %v122, %v141
    %v143 = vlaneseq
    %v144 = vshrl.u32 %v143, 7
    %v145 = vsub.s32 0, %v144
    %v146 = vrot.slane %v126, %v145
    %v147 = vlaneseq
    %v148 = vshrl.u32 %v147, 7
    %v149 = vsub.s32 0, %v148
    %v150 = vrot.slane %v130, %v149
    %v151 = vlaneseq
    %v152 = vshrl.u32 %v151, 7
    %v153 = vsub.s32 0, %v152
    %v154 = vrot.slane %v134, %v153
    %vm155 = vcmask 130048
    %v157 = vsel %vm155, %v108, 0
    %159 = vmatprep.subr.mxu0 %v110
    %160 = vmatpush1.msra.mxu0 %v109
    %161 = vmatprep.subr.mxu0 %v114
    %162 = vmatpush1.msra.mxu0 %v113
    %163 = vmatprep.subr.mxu0 0.0
    %164 = vmatpush1.msra.mxu0 0.0
    %165 = vmatprep.subr.mxu0 0.0
    %166 = vmatpush1.msra.mxu0 0.0
    %167 = vmatprep.subr.mxu0 0.0
    %168 = vmatpush1.msra.mxu0 0.0
    %169 = vmatprep.subr.mxu0 0.0
    %170 = vmatpush1.msra.mxu0 0.0
    %171 = vmatprep.subr.mxu0 0.0
    %172 = vmatpush1.msra.mxu0 0.0
    %173 = vmatprep.subr.mxu0 0.0
    %174 = vmatpush1.msra.mxu0 0.0
    %175 = vmatprep.subr.mxu0 0.0
    %176 = vmatpush1.msra.mxu0 0.0
    %177 = vmatprep.subr.mxu0 0.0
    %178 = vmatpush1.msra.mxu0 0.0
    %179 = vmatprep.subr.mxu0 0.0
    %180 = vmatpush1.msra.mxu0 0.0
    %181 = vmatprep.subr.mxu0 0.0
    %182 = vmatpush1.msra.mxu0 0.0
    %183 = vmatprep.subr.mxu0 0.0
    %184 = vmatpush1.msra.mxu0 0.0
    %185 = vmatprep.subr.mxu0 0.0
    %186 = vmatpush1.msra.mxu0 0.0
    %187 = vmatprep.subr.mxu0 0.0
    %188 = vmatpush1.msra.mxu0 0.0
    %189 = vmatprep.subr.mxu0 0.0
    %190 = vmatpush1.msra.mxu0 0.0
    %191 = vmatprep.subr.mxu0 0.0
    %192 = vmatpush1.msra.mxu0 0.0
    %193 = vmatprep.subr.mxu0 0.0
    %194 = vmatpush1.msra.mxu0 0.0
    %195 = vmatprep.subr.mxu0 0.0
    %196 = vmatpush1.msra.mxu0 0.0
    %197 = vmatprep.subr.mxu0 0.0
    %198 = vmatpush1.msra.mxu0 0.0
    %199 = vmatprep.subr.mxu0 0.0
    %200 = vmatpush1.msra.mxu0 0.0
    %201 = vmatprep.subr.mxu0 0.0
    %202 = vmatpush1.msra.mxu0 0.0
    %203 = vmatprep.subr.mxu0 0.0
    %204 = vmatpush1.msra.mxu0 0.0
    %205 = vmatprep.subr.mxu0 0.0
    %206 = vmatpush1.msra.mxu0 0.0
    %207 = vmatprep.subr.mxu0 0.0
    %208 = vmatpush1.msra.mxu0 0.0
    %209 = vmatprep.subr.mxu0 0.0
    %210 = vmatpush1.msra.mxu0 0.0
    %211 = vmatprep.subr.mxu0 0.0
    %212 = vmatpush1.msra.mxu0 0.0
    %213 = vmatprep.subr.mxu0 0.0
    %214 = vmatpush1.msra.mxu0 0.0
    %215 = vmatprep.subr.mxu0 0.0
    %216 = vmatpush1.msra.mxu0 0.0
    %217 = vmatprep.subr.mxu0 0.0
    %218 = vmatpush1.msra.mxu0 0.0
    %219 = vmatprep.subr.mxu0 0.0
    %220 = vmatpush1.msra.mxu0 0.0
    %221 = vmatprep.subr.mxu0 0.0
    %222 = vmatpush1.msra.mxu0 0.0
    %223 = vmatprep.mubr.f32.mxu0 0.0
    %224 = vmatmul.mubr.f32.gmra.mrb[0].mxu0 %v157
    %v225 = vpop.f32.mrb[0].mxu0
    %v226 = vadd.f32 %v142, %v225
    %v227 = vpop.f32.mrb[0].mxu0
    %v228 = vadd.f32 %v146, %v227
    %229 = vdwg.mxu0
    %230 = vmatprep.subr.mxu0 %v112
    %231 = vmatpush1.msra.mxu0 %v111
    %232 = vmatprep.subr.mxu0 %v116
    %233 = vmatpush1.msra.mxu0 %v115
    %234 = vmatprep.subr.mxu0 0.0
    %235 = vmatpush1.msra.mxu0 0.0
    %236 = vmatprep.subr.mxu0 0.0
    %237 = vmatpush1.msra.mxu0 0.0
    %238 = vmatprep.subr.mxu0 0.0
    %239 = vmatpush1.msra.mxu0 0.0
    %240 = vmatprep.subr.mxu0 0.0
    %241 = vmatpush1.msra.mxu0 0.0
    %242 = vmatprep.subr.mxu0 0.0
    %243 = vmatpush1.msra.mxu0 0.0
    %244 = vmatprep.subr.mxu0 0.0
    %245 = vmatpush1.msra.mxu0 0.0
    %246 = vmatprep.subr.mxu0 0.0
    %247 = vmatpush1.msra.mxu0 0.0
    %248 = vmatprep.subr.mxu0 0.0
    %249 = vmatpush1.msra.mxu0 0.0
    %250 = vmatprep.subr.mxu0 0.0
    %251 = vmatpush1.msra.mxu0 0.0
    %252 = vmatprep.subr.mxu0 0.0
    %253 = vmatpush1.msra.mxu0 0.0
    %254 = vmatprep.subr.mxu0 0.0
    %255 = vmatpush1.msra.mxu0 0.0
    %256 = vmatprep.subr.mxu0 0.0
    %257 = vmatpush1.msra.mxu0 0.0
    %258 = vmatprep.subr.mxu0 0.0
    %259 = vmatpush1.msra.mxu0 0.0
    %260 = vmatprep.subr.mxu0 0.0
    %261 = vmatpush1.msra.mxu0 0.0
    %262 = vmatprep.subr.mxu0 0.0
    %263 = vmatpush1.msra.mxu0 0.0
    %264 = vmatprep.subr.mxu0 0.0
    %265 = vmatpush1.msra.mxu0 0.0
    %266 = vmatprep.subr.mxu0 0.0
    %267 = vmatpush1.msra.mxu0 0.0
    %268 = vmatprep.subr.mxu0 0.0
    %269 = vmatpush1.msra.mxu0 0.0
    %270 = vmatprep.subr.mxu0 0.0
    %271 = vmatpush1.msra.mxu0 0.0
    %272 = vmatprep.subr.mxu0 0.0
    %273 = vmatpush1.msra.mxu0 0.0
    %274 = vmatprep.subr.mxu0 0.0
    %275 = vmatpush1.msra.mxu0 0.0
    %276 = vmatprep.subr.mxu0 0.0
    %277 = vmatpush1.msra.mxu0 0.0
    %278 = vmatprep.subr.mxu0 0.0
    %279 = vmatpush1.msra.mxu0 0.0
    %280 = vmatprep.subr.mxu0 0.0
    %281 = vmatpush1.msra.mxu0 0.0
    %282 = vmatprep.subr.mxu0 0.0
    %283 = vmatpush1.msra.mxu0 0.0
    %284 = vmatprep.subr.mxu0 0.0
    %285 = vmatpush1.msra.mxu0 0.0
    %286 = vmatprep.subr.mxu0 0.0
    %287 = vmatpush1.msra.mxu0 0.0
    %288 = vmatprep.subr.mxu0 0.0
    %289 = vmatpush1.msra.mxu0 0.0
    %290 = vmatprep.subr.mxu0 0.0
    %291 = vmatpush1.msra.mxu0 0.0
    %292 = vmatprep.subr.mxu0 0.0
    %293 = vmatpush1.msra.mxu0 0.0
    %294 = vmatprep.mubr.f32.mxu0 0.0
    %295 = vmatmul.mubr.f32.gmra.mrb[0].mxu0 %v157
    %v296 = vpop.f32.mrb[0].mxu0
    %v297 = vadd.f32 %v150, %v296
    %v298 = vpop.f32.mrb[0].mxu0
    %v299 = vadd.f32 %v154, %v298
    %300 = vdwg.mxu0
    %v301 = vmax.f32 %v226, 0.0
    %v302 = vmax.f32 %v228, 0.0
    %v303 = vmax.f32 %v297, 0.0
    %v304 = vmax.f32 %v299, 0.0
    %v305 = vrot.slane %v301, 4
    %v306 = vadd.f32 %v301, %v305
    %v307 = vrot.slane %v306, 2
    %v308 = vadd.f32 %v306, %v307
    %v309 = vrot.slane %v308, 1
    %v310 = vadd.f32 %v308, %v309
    %v311 = vrot.slane %v302, 4
    %v312 = vadd.f32 %v302, %v311
    %v313 = vrot.slane %v312, 2
    %v314 = vadd.f32 %v312, %v313
    %v315 = vrot.slane %v314, 1
    %v316 = vadd.f32 %v314, %v315
    %v317 = vrot.slane %v303, 4
    %v318 = vadd.f32 %v303, %v317
    %v319 = vrot.slane %v318, 2
    %v320 = vadd.f32 %v318, %v319
    %v321 = vrot.slane %v320, 1
    %v322 = vadd.f32 %v320, %v321
    %v323 = vrot.slane %v304, 4
    %v324 = vadd.f32 %v304, %v323
    %v325 = vrot.slane %v324, 2
    %v326 = vadd.f32 %v324, %v325
    %v327 = vrot.slane %v326, 1
    %v328 = vadd.f32 %v326, %v327
    %v329 = vmul.f32 %v301, %v301
    %v330 = vmul.f32 %v302, %v302
    %v331 = vmul.f32 %v303, %v303
    %v332 = vmul.f32 %v304, %v304
    %v333 = vrot.slane %v329, 4
    %v334 = vadd.f32 %v329, %v333
    %v335 = vrot.slane %v334, 2
    %v336 = vadd.f32 %v334, %v335
    %v337 = vrot.slane %v336, 1
    %v338 = vadd.f32 %v336, %v337
    %v339 = vrot.slane %v330, 4
    %v340 = vadd.f32 %v330, %v339
    %v341 = vrot.slane %v340, 2
    %v342 = vadd.f32 %v340, %v341
    %v343 = vrot.slane %v342, 1
    %v344 = vadd.f32 %v342, %v343
    %v345 = vrot.slane %v331, 4
    %v346 = vadd.f32 %v331, %v345
    %v347 = vrot.slane %v346, 2
    %v348 = vadd.f32 %v346, %v347
    %v349 = vrot.slane %v348, 1
    %v350 = vadd.f32 %v348, %v349
    %v351 = vrot.slane %v332, 4
    %v352 = vadd.f32 %v332, %v351
    %v353 = vrot.slane %v352, 2
    %v354 = vadd.f32 %v352, %v353
    %v355 = vrot.slane %v354, 1
    %v356 = vadd.f32 %v354, %v355
    %v357 = vmul.f32 %v310, 0.125
    %v358 = vmul.f32 %v316, 0.125
    %v359 = vmul.f32 %v322, 0.125
    %v360 = vmul.f32 %v328, 0.125
    %v361 = vmul.f32 %v338, 0.125
    %v362 = vmul.f32 %v344, 0.125
    %v363 = vmul.f32 %v350, 0.125
    %v364 = vmul.f32 %v356, 0.125
    %v365 = vmul.f32 %v357, %v357
    %v366 = vmul.f32 %v358, %v358
    %v367 = vmul.f32 %v359, %v359
    %v368 = vmul.f32 %v360, %v360
    %v369 = vsub.f32 %v361, %v365
    %v370 = vsub.f32 %v362, %v366
    %v371 = vsub.f32 %v363, %v367
    %v372 = vsub.f32 %v364, %v368
    %v373 = vmax.f32 %v369, 0.0
    %v374 = vmax.f32 %v370, 0.0
    %v375 = vmax.f32 %v371, 0.0
    %v376 = vmax.f32 %v372, 0.0
    %v377 = vadd.f32 %v373, 1e-05
    %v378 = vadd.f32 %v374, 1e-05
    %v379 = vadd.f32 %v375, 1e-05
    %v380 = vadd.f32 %v376, 1e-05
    %v381 = vrsqrt.pop %v377
    %v382 = vrsqrt.pop %v378
    %v383 = vrsqrt.pop %v379
    %v384 = vrsqrt.pop %v380
    %v385 = vlaneseq
    %v386 = vshrl.u32 %v385, 7
    %v387 = vsub.s32 1, %v386
    %v388 = vrot.slane %v105, %v387
    %v389 = vlaneseq
    %v390 = vshrl.u32 %v389, 7
    %v391 = vsub.s32 5, %v390
    %v392 = vrot.slane %v105, %v391
    %v393 = vlaneseq
    %v394 = vshrl.u32 %v393, 7
    %v395 = vsub.s32 1, %v394
    %v396 = vrot.slane %v106, %v395
    %v397 = vlaneseq
    %v398 = vshrl.u32 %v397, 7
    %v399 = vsub.s32 5, %v398
    %v400 = vrot.slane %v106, %v399
    %v405 = vmul.f32 %v381, %v388
    %v406 = vmul.f32 %v382, %v392
    %v407 = vmul.f32 %v383, %v396
    %v408 = vmul.f32 %v384, %v400
    %v409 = vmul.f32 %v357, %v405
    %v410 = vmul.f32 %v358, %v406
    %v411 = vmul.f32 %v359, %v407
    %v412 = vmul.f32 %v360, %v408
    %v417 = vcombine.low %v409, %v410
    %v418 = vcombine.low %v411, %v412
    %v419 = vrot.slane %v417, 6
    %v420 = vrot.slane %v418, 6
    %v423 = vsub.f32 %v105, %v419
    %v424 = vsub.f32 %v106, %v420
    %v425 = vlaneseq
    %v426 = vshrl.u32 %v425, 7
    %v427 = vsub.s32 0, %v426
    %v428 = vrot.slane %v405, %v427
    %v429 = vlaneseq
    %v430 = vshrl.u32 %v429, 7
    %v431 = vsub.s32 0, %v430
    %v432 = vrot.slane %v406, %v431
    %v433 = vlaneseq
    %v434 = vshrl.u32 %v433, 7
    %v435 = vsub.s32 0, %v434
    %v436 = vrot.slane %v407, %v435
    %v437 = vlaneseq
    %v438 = vshrl.u32 %v437, 7
    %v439 = vsub.s32 0, %v438
    %v440 = vrot.slane %v408, %v439
    %v441 = vmul.f32 %v301, %v428
    %v442 = vmul.f32 %v302, %v432
    %v443 = vmul.f32 %v303, %v436
    %v444 = vmul.f32 %v304, %v440
    %v447 = vlaneseq
    %v448 = vshrl.u32 %v447, 7
    %v449 = vsub.s32 2, %v448
    %v450 = vrot.slane %v423, %v449
    %v451 = vlaneseq
    %v452 = vshrl.u32 %v451, 7
    %v453 = vsub.s32 6, %v452
    %v454 = vrot.slane %v423, %v453
    %v455 = vlaneseq
    %v456 = vshrl.u32 %v455, 7
    %v457 = vsub.s32 2, %v456
    %v458 = vrot.slane %v424, %v457
    %v459 = vlaneseq
    %v460 = vshrl.u32 %v459, 7
    %v461 = vsub.s32 6, %v460
    %v462 = vrot.slane %v424, %v461
    %v467 = vlaneseq
    %v468 = vshrl.u32 %v467, 7
    %v469 = vsub.s32 2, %v468
    %v470 = vrot.slane %v450, %v469
    %v471 = vlaneseq
    %v472 = vshrl.u32 %v471, 7
    %v473 = vsub.s32 2, %v472
    %v474 = vrot.slane %v454, %v473
    %v475 = vlaneseq
    %v476 = vshrl.u32 %v475, 7
    %v477 = vsub.s32 2, %v476
    %v478 = vrot.slane %v458, %v477
    %v479 = vlaneseq
    %v480 = vshrl.u32 %v479, 7
    %v481 = vsub.s32 2, %v480
    %v482 = vrot.slane %v462, %v481
    %v483 = vadd.f32 %v441, %v470
    %v484 = vadd.f32 %v442, %v474
    %v485 = vadd.f32 %v443, %v478
    %v486 = vadd.f32 %v444, %v482
    %v487 = vld [vmem:[#allocation4] sm:$0xff]
    %v488 = vld [vmem:[#allocation4 + $0x8] sm:$0xff]
    %v489 = vld [vmem:[#allocation4 + $0x10] sm:$0xff]
    %v490 = vld [vmem:[#allocation4 + $0x18] sm:$0xff]
    %v491 = vld [vmem:[#allocation4 + $0x20] sm:$0xff]
    %v492 = vld [vmem:[#allocation4 + $0x28] sm:$0xff]
    %v493 = vld [vmem:[#allocation4 + $0x30] sm:$0xff]
    %v494 = vld [vmem:[#allocation4 + $0x38] sm:$0xff]
    %v495 = vld [vmem:[#allocation4 + $0x40] sm:$0xff]
    %v496 = vld [vmem:[#allocation4 + $0x48] sm:$0xff]
    %v497 = vld [vmem:[#allocation4 + $0x50] sm:$0xff]
    %v498 = vld [vmem:[#allocation4 + $0x58] sm:$0xff]
    %v499 = vld [vmem:[#allocation4 + $0x60] sm:$0xff]
    %v500 = vld [vmem:[#allocation4 + $0x68] sm:$0xff]
    %v501 = vld [vmem:[#allocation4 + $0x70] sm:$0xff]
    %v502 = vld [vmem:[#allocation4 + $0x78] sm:$0xff]
    %v503 = vld [vmem:[#allocation4 + $0x80] sm:$0xff]
    %v504 = vld [vmem:[#allocation4 + $0x88] sm:$0xff]
    %v505 = vld [vmem:[#allocation4 + $0x90] sm:$0xff]
    %v506 = vld [vmem:[#allocation4 + $0x98] sm:$0xff]
    %v507 = vld [vmem:[#allocation4 + $0xa0] sm:$0xff]
    %v508 = vld [vmem:[#allocation4 + $0xa8] sm:$0xff]
    %v509 = vld [vmem:[#allocation4 + $0xb0] sm:$0xff]
    %v510 = vld [vmem:[#allocation4 + $0xb8] sm:$0xff]
    %v511 = vld [vmem:[#allocation4 + $0xc0] sm:$0xff]
    %v512 = vld [vmem:[#allocation4 + $0xc8] sm:$0xff]
    %v513 = vld [vmem:[#allocation4 + $0xd0] sm:$0xff]
    %v514 = vld [vmem:[#allocation4 + $0xd8] sm:$0xff]
    %v515 = vld [vmem:[#allocation4 + $0xe0] sm:$0xff]
    %v516 = vld [vmem:[#allocation4 + $0xe8] sm:$0xff]
    %v517 = vld [vmem:[#allocation4 + $0xf0] sm:$0xff]
    %v518 = vld [vmem:[#allocation4 + $0xf8] sm:$0xff]
    %v519 = vld [vmem:[#allocation4 + $0x100] sm:$0xff]
    %v520 = vld [vmem:[#allocation4 + $0x108] sm:$0xff]
    %v521 = vld [vmem:[#allocation4 + $0x110] sm:$0xff]
    %v522 = vld [vmem:[#allocation4 + $0x118] sm:$0xff]
    %v523 = vld [vmem:[#allocation4 + $0x120] sm:$0xff]
    %v524 = vld [vmem:[#allocation4 + $0x128] sm:$0xff]
    %v525 = vld [vmem:[#allocation4 + $0x130] sm:$0xff]
    %v526 = vld [vmem:[#allocation4 + $0x138] sm:$0xff]
    %v527 = vld [vmem:[#allocation4 + $0x140] sm:$0xff]
    %v528 = vld [vmem:[#allocation4 + $0x148] sm:$0xff]
    %v529 = vld [vmem:[#allocation4 + $0x150] sm:$0xff]
    %v530 = vld [vmem:[#allocation4 + $0x158] sm:$0xff]
    %v531 = vld [vmem:[#allocation4 + $0x160] sm:$0xff]
    %v532 = vld [vmem:[#allocation4 + $0x168] sm:$0xff]
    %v533 = vld [vmem:[#allocation4 + $0x170] sm:$0xff]
    %v534 = vld [vmem:[#allocation4 + $0x178] sm:$0xff]
    %v535 = vld [vmem:[#allocation4 + $0x180] sm:$0xff]
    %v536 = vld [vmem:[#allocation4 + $0x188] sm:$0xff]
    %v537 = vld [vmem:[#allocation4 + $0x190] sm:$0xff]
    %v538 = vld [vmem:[#allocation4 + $0x198] sm:$0xff]
    %v539 = vld [vmem:[#allocation4 + $0x1a0] sm:$0xff]
    %v540 = vld [vmem:[#allocation4 + $0x1a8] sm:$0xff]
    %v541 = vld [vmem:[#allocation4 + $0x1b0] sm:$0xff]
    %v542 = vld [vmem:[#allocation4 + $0x1b8] sm:$0xff]
    %v543 = vld [vmem:[#allocation4 + $0x1c0] sm:$0xff]
    %v544 = vld [vmem:[#allocation4 + $0x1c8] sm:$0xff]
    %v545 = vld [vmem:[#allocation4 + $0x1d0] sm:$0xff]
    %v546 = vld [vmem:[#allocation4 + $0x1d8] sm:$0xff]
    %v547 = vld [vmem:[#allocation4 + $0x1e0] sm:$0xff]
    %v548 = vld [vmem:[#allocation4 + $0x1e8] sm:$0xff]
    %v549 = vld [vmem:[#allocation4 + $0x1f0] sm:$0xff]
    %v550 = vld [vmem:[#allocation4 + $0x1f8] sm:$0xff]
    %v551 = vld [vmem:[#allocation4 + $0x200] sm:$0xff]
    %v552 = vld [vmem:[#allocation4 + $0x208] sm:$0xff]
    %v553 = vld [vmem:[#allocation4 + $0x210] sm:$0xff]
    %v554 = vld [vmem:[#allocation4 + $0x218] sm:$0xff]
    %v555 = vld [vmem:[#allocation4 + $0x220] sm:$0xff]
    %v556 = vld [vmem:[#allocation4 + $0x228] sm:$0xff]
    %v557 = vld [vmem:[#allocation4 + $0x230] sm:$0xff]
    %v558 = vld [vmem:[#allocation4 + $0x238] sm:$0xff]
    %v559 = vld [vmem:[#allocation4 + $0x240] sm:$0xff]
    %v560 = vld [vmem:[#allocation4 + $0x248] sm:$0xff]
    %v561 = vld [vmem:[#allocation4 + $0x250] sm:$0xff]
    %v562 = vld [vmem:[#allocation4 + $0x258] sm:$0xff]
    %v563 = vld [vmem:[#allocation4 + $0x260] sm:$0xff]
    %v564 = vld [vmem:[#allocation4 + $0x268] sm:$0xff]
    %v565 = vld [vmem:[#allocation4 + $0x270] sm:$0xff]
    %v566 = vld [vmem:[#allocation4 + $0x278] sm:$0xff]
    %v567 = vld [vmem:[#allocation4 + $0x280] sm:$0xff]
    %v568 = vld [vmem:[#allocation4 + $0x288] sm:$0xff]
    %v569 = vld [vmem:[#allocation4 + $0x290] sm:$0xff]
    %v570 = vld [vmem:[#allocation4 + $0x298] sm:$0xff]
    %v571 = vld [vmem:[#allocation4 + $0x2a0] sm:$0xff]
    %v572 = vld [vmem:[#allocation4 + $0x2a8] sm:$0xff]
    %v573 = vld [vmem:[#allocation4 + $0x2b0] sm:$0xff]
    %v574 = vld [vmem:[#allocation4 + $0x2b8] sm:$0xff]
    %v575 = vld [vmem:[#allocation4 + $0x2c0] sm:$0xff]
    %v576 = vld [vmem:[#allocation4 + $0x2c8] sm:$0xff]
    %v577 = vld [vmem:[#allocation4 + $0x2d0] sm:$0xff]
    %v578 = vld [vmem:[#allocation4 + $0x2d8] sm:$0xff]
    %v579 = vld [vmem:[#allocation4 + $0x2e0] sm:$0xff]
    %v580 = vld [vmem:[#allocation4 + $0x2e8] sm:$0xff]
    %v581 = vld [vmem:[#allocation4 + $0x2f0] sm:$0xff]
    %v582 = vld [vmem:[#allocation4 + $0x2f8] sm:$0xff]
    %v583 = vld [vmem:[#allocation4 + $0x300] sm:$0xff]
    %v584 = vld [vmem:[#allocation4 + $0x308] sm:$0xff]
    %v585 = vld [vmem:[#allocation4 + $0x310] sm:$0xff]
    %v586 = vld [vmem:[#allocation4 + $0x318] sm:$0xff]
    %v587 = vld [vmem:[#allocation4 + $0x320] sm:$0xff]
    %v588 = vld [vmem:[#allocation4 + $0x328] sm:$0xff]
    %v589 = vld [vmem:[#allocation4 + $0x330] sm:$0xff]
    %v590 = vld [vmem:[#allocation4 + $0x338] sm:$0xff]
    %v591 = vld [vmem:[#allocation4 + $0x340] sm:$0xff]
    %v592 = vld [vmem:[#allocation4 + $0x348] sm:$0xff]
    %v593 = vld [vmem:[#allocation4 + $0x350] sm:$0xff]
    %v594 = vld [vmem:[#allocation4 + $0x358] sm:$0xff]
    %v595 = vld [vmem:[#allocation4 + $0x360] sm:$0xff]
    %v596 = vld [vmem:[#allocation4 + $0x368] sm:$0xff]
    %v597 = vld [vmem:[#allocation4 + $0x370] sm:$0xff]
    %v598 = vld [vmem:[#allocation4 + $0x378] sm:$0xff]
    %v599 = vld [vmem:[#allocation4 + $0x380] sm:$0xff]
    %v600 = vld [vmem:[#allocation4 + $0x388] sm:$0xff]
    %v601 = vld [vmem:[#allocation4 + $0x390] sm:$0xff]
    %v602 = vld [vmem:[#allocation4 + $0x398] sm:$0xff]
    %v603 = vld [vmem:[#allocation4 + $0x3a0] sm:$0xff]
    %v604 = vld [vmem:[#allocation4 + $0x3a8] sm:$0xff]
    %v605 = vld [vmem:[#allocation4 + $0x3b0] sm:$0xff]
    %v606 = vld [vmem:[#allocation4 + $0x3b8] sm:$0xff]
    %v607 = vld [vmem:[#allocation4 + $0x3c0] sm:$0xff]
    %v608 = vld [vmem:[#allocation4 + $0x3c8] sm:$0xff]
    %v609 = vld [vmem:[#allocation4 + $0x3d0] sm:$0xff]
    %v610 = vld [vmem:[#allocation4 + $0x3d8] sm:$0xff]
    %v611 = vld [vmem:[#allocation4 + $0x3e0] sm:$0xff]
    %v612 = vld [vmem:[#allocation4 + $0x3e8] sm:$0xff]
    %v613 = vld [vmem:[#allocation4 + $0x3f0] sm:$0xff]
    %v614 = vld [vmem:[#allocation4 + $0x3f8] sm:$0xff]
    %v615 = vld [vmem:[%s1] sm:$0xff]
    %v616 = vld [vmem:[#allocation6] sm:$0xff]
    %v617 = vld [vmem:[#allocation6 + $0x8] sm:$0xff]
    %v618 = vld [vmem:[#allocation6 + $0x10] sm:$0xff]
    %v619 = vld [vmem:[#allocation6 + $0x18] sm:$0xff]
    %v620 = vld [vmem:[#allocation6 + $0x20] sm:$0xff]
    %v621 = vld [vmem:[#allocation6 + $0x28] sm:$0xff]
    %v622 = vld [vmem:[#allocation6 + $0x30] sm:$0xff]
    %v623 = vld [vmem:[#allocation6 + $0x38] sm:$0xff]
    %v624 = vld [vmem:[#allocation6 + $0x40] sm:$0xff]
    %v625 = vld [vmem:[#allocation6 + $0x48] sm:$0xff]
    %v626 = vld [vmem:[#allocation6 + $0x50] sm:$0xff]
    %v627 = vld [vmem:[#allocation6 + $0x58] sm:$0xff]
    %v628 = vld [vmem:[#allocation6 + $0x60] sm:$0xff]
    %v629 = vld [vmem:[#allocation6 + $0x68] sm:$0xff]
    %v630 = vld [vmem:[#allocation6 + $0x70] sm:$0xff]
    %v631 = vld [vmem:[#allocation6 + $0x78] sm:$0xff]
    %v632 = vld [vmem:[#allocation6 + $0x80] sm:$0xff]
    %v633 = vld [vmem:[#allocation6 + $0x88] sm:$0xff]
    %v634 = vld [vmem:[#allocation6 + $0x90] sm:$0xff]
    %v635 = vld [vmem:[#allocation6 + $0x98] sm:$0xff]
    %v636 = vld [vmem:[#allocation6 + $0xa0] sm:$0xff]
    %v637 = vld [vmem:[#allocation6 + $0xa8] sm:$0xff]
    %v638 = vld [vmem:[#allocation6 + $0xb0] sm:$0xff]
    %v639 = vld [vmem:[#allocation6 + $0xb8] sm:$0xff]
    %v640 = vld [vmem:[#allocation6 + $0xc0] sm:$0xff]
    %v641 = vld [vmem:[#allocation6 + $0xc8] sm:$0xff]
    %v642 = vld [vmem:[#allocation6 + $0xd0] sm:$0xff]
    %v643 = vld [vmem:[#allocation6 + $0xd8] sm:$0xff]
    %v644 = vld [vmem:[#allocation6 + $0xe0] sm:$0xff]
    %v645 = vld [vmem:[#allocation6 + $0xe8] sm:$0xff]
    %v646 = vld [vmem:[#allocation6 + $0xf0] sm:$0xff]
    %v647 = vld [vmem:[#allocation6 + $0xf8] sm:$0xff]
    %648 = vmatprep.subr.mxu0 %v617
    %649 = vmatpush1.msra.mxu0 %v616
    %650 = vmatprep.subr.mxu0 %v619
    %651 = vmatpush1.msra.mxu0 %v618
    %652 = vmatprep.subr.mxu0 %v621
    %653 = vmatpush1.msra.mxu0 %v620
    %654 = vmatprep.subr.mxu0 %v623
    %655 = vmatpush1.msra.mxu0 %v622
    %656 = vmatprep.subr.mxu0 %v625
    %657 = vmatpush1.msra.mxu0 %v624
    %658 = vmatprep.subr.mxu0 %v627
    %659 = vmatpush1.msra.mxu0 %v626
    %660 = vmatprep.subr.mxu0 %v629
    %661 = vmatpush1.msra.mxu0 %v628
    %662 = vmatprep.subr.mxu0 %v631
    %663 = vmatpush1.msra.mxu0 %v630
    %664 = vmatprep.subr.mxu0 %v633
    %665 = vmatpush1.msra.mxu0 %v632
    %666 = vmatprep.subr.mxu0 %v635
    %667 = vmatpush1.msra.mxu0 %v634
    %668 = vmatprep.subr.mxu0 %v637
    %669 = vmatpush1.msra.mxu0 %v636
    %670 = vmatprep.subr.mxu0 %v639
    %671 = vmatpush1.msra.mxu0 %v638
    %672 = vmatprep.subr.mxu0 %v641
    %673 = vmatpush1.msra.mxu0 %v640
    %674 = vmatprep.subr.mxu0 %v643
    %675 = vmatpush1.msra.mxu0 %v642
    %676 = vmatprep.subr.mxu0 %v645
    %677 = vmatpush1.msra.mxu0 %v644
    %678 = vmatprep.subr.mxu0 %v647
    %679 = vmatpush1.msra.mxu0 %v646
    %680 = vmatprep.subr.mxu0 0.0
    %681 = vmatpush1.msra.mxu0 0.0
    %682 = vmatprep.subr.mxu0 0.0
    %683 = vmatpush1.msra.mxu0 0.0
    %684 = vmatprep.subr.mxu0 0.0
    %685 = vmatpush1.msra.mxu0 0.0
    %686 = vmatprep.subr.mxu0 0.0
    %687 = vmatpush1.msra.mxu0 0.0
    %688 = vmatprep.subr.mxu0 0.0
    %689 = vmatpush1.msra.mxu0 0.0
    %690 = vmatprep.subr.mxu0 0.0
    %691 = vmatpush1.msra.mxu0 0.0
    %692 = vmatprep.subr.mxu0 0.0
    %693 = vmatpush1.msra.mxu0 0.0
    %694 = vmatprep.subr.mxu0 0.0
    %695 = vmatpush1.msra.mxu0 0.0
    %696 = vmatprep.subr.mxu0 0.0
    %697 = vmatpush1.msra.mxu0 0.0
    %698 = vmatprep.subr.mxu0 0.0
    %699 = vmatpush1.msra.mxu0 0.0
    %700 = vmatprep.subr.mxu0 0.0
    %701 = vmatpush1.msra.mxu0 0.0
    %702 = vmatprep.subr.mxu0 0.0
    %703 = vmatpush1.msra.mxu0 0.0
    %704 = vmatprep.subr.mxu0 0.0
    %705 = vmatpush1.msra.mxu0 0.0
    %706 = vmatprep.subr.mxu0 0.0
    %707 = vmatpush1.msra.mxu0 0.0
    %708 = vmatprep.subr.mxu0 0.0
    %709 = vmatpush1.msra.mxu0 0.0
    %710 = vmatprep.subr.mxu0 0.0
    %711 = vmatpush1.msra.mxu0 0.0
    %712 = vmatprep.mubr.f32.mxu0 0.0
    %713 = vmatmul.mubr.f32.gmra.mrb[0].mxu0 %v615
    %v714 = vpop.f32.mrb[0].mxu0
    %v715 = vadd.f32 0.0, %v714
    %v716 = vpop.f32.mrb[0].mxu0
    %v717 = vadd.f32 0.0, %v716
    %718 = vdwg.mxu0
    %719 = vmatprep.subr.mxu0 %v488
    %720 = vmatpush1.msra.mxu0 %v487
    %721 = vmatprep.subr.mxu0 %v490
    %722 = vmatpush1.msra.mxu0 %v489
    %723 = vmatprep.subr.mxu0 %v492
    %724 = vmatpush1.msra.mxu0 %v491
    %725 = vmatprep.subr.mxu0 %v494
    %726 = vmatpush1.msra.mxu0 %v493
    %727 = vmatprep.subr.mxu0 %v496
    %728 = vmatpush1.msra.mxu0 %v495
    %729 = vmatprep.subr.mxu0 %v498
    %730 = vmatpush1.msra.mxu0 %v497
    %731 = vmatprep.subr.mxu0 %v500
    %732 = vmatpush1.msra.mxu0 %v499
    %733 = vmatprep.subr.mxu0 %v502
    %734 = vmatpush1.msra.mxu0 %v501
    %735 = vmatprep.subr.mxu0 %v504
    %736 = vmatpush1.msra.mxu0 %v503
    %737 = vmatprep.subr.mxu0 %v506
    %738 = vmatpush1.msra.mxu0 %v505
    %739 = vmatprep.subr.mxu0 %v508
    %740 = vmatpush1.msra.mxu0 %v507
    %741 = vmatprep.subr.mxu0 %v510
    %742 = vmatpush1.msra.mxu0 %v509
    %743 = vmatprep.subr.mxu0 %v512
    %744 = vmatpush1.msra.mxu0 %v511
    %745 = vmatprep.subr.mxu0 %v514
    %746 = vmatpush1.msra.mxu0 %v513
    %747 = vmatprep.subr.mxu0 %v516
    %748 = vmatpush1.msra.mxu0 %v515
    %749 = vmatprep.subr.mxu0 %v518
    %750 = vmatpush1.msra.mxu0 %v517
    %751 = vmatprep.subr.mxu0 %v520
    %752 = vmatpush1.msra.mxu0 %v519
    %753 = vmatprep.subr.mxu0 %v522
    %754 = vmatpush1.msra.mxu0 %v521
    %755 = vmatprep.subr.mxu0 %v524
    %756 = vmatpush1.msra.mxu0 %v523
    %757 = vmatprep.subr.mxu0 %v526
    %758 = vmatpush1.msra.mxu0 %v525
    %759 = vmatprep.subr.mxu0 %v528
    %760 = vmatpush1.msra.mxu0 %v527
    %761 = vmatprep.subr.mxu0 %v530
    %762 = vmatpush1.msra.mxu0 %v529
    %763 = vmatprep.subr.mxu0 %v532
    %764 = vmatpush1.msra.mxu0 %v531
    %765 = vmatprep.subr.mxu0 %v534
    %766 = vmatpush1.msra.mxu0 %v533
    %767 = vmatprep.subr.mxu0 %v536
    %768 = vmatpush1.msra.mxu0 %v535
    %769 = vmatprep.subr.mxu0 %v538
    %770 = vmatpush1.msra.mxu0 %v537
    %771 = vmatprep.subr.mxu0 %v540
    %772 = vmatpush1.msra.mxu0 %v539
    %773 = vmatprep.subr.mxu0 %v542
    %774 = vmatpush1.msra.mxu0 %v541
    %775 = vmatprep.subr.mxu0 %v544
    %776 = vmatpush1.msra.mxu0 %v543
    %777 = vmatprep.subr.mxu0 %v546
    %778 = vmatpush1.msra.mxu0 %v545
    %779 = vmatprep.subr.mxu0 %v548
    %780 = vmatpush1.msra.mxu0 %v547
    %781 = vmatprep.subr.mxu0 %v550
    %782 = vmatpush1.msra.mxu0 %v549
    %783 = vmatprep.mubr.f32.mxu0 %v484
    %784 = vmatmul.mubr.f32.gmra.mrb[0].mxu0 %v483
    %v785 = vpop.f32.mrb[0].mxu0
    %v786 = vadd.f32 %v715, %v785
    %v787 = vpop.f32.mrb[0].mxu0
    %v788 = vadd.f32 %v717, %v787
    %789 = vdwg.mxu0
    %790 = vmatprep.subr.mxu0 %v552
    %791 = vmatpush1.msra.mxu0 %v551
    %792 = vmatprep.subr.mxu0 %v554
    %793 = vmatpush1.msra.mxu0 %v553
    %794 = vmatprep.subr.mxu0 %v556
    %795 = vmatpush1.msra.mxu0 %v555
    %796 = vmatprep.subr.mxu0 %v558
    %797 = vmatpush1.msra.mxu0 %v557
    %798 = vmatprep.subr.mxu0 %v560
    %799 = vmatpush1.msra.mxu0 %v559
    %800 = vmatprep.subr.mxu0 %v562
    %801 = vmatpush1.msra.mxu0 %v561
    %802 = vmatprep.subr.mxu0 %v564
    %803 = vmatpush1.msra.mxu0 %v563
    %804 = vmatprep.subr.mxu0 %v566
    %805 = vmatpush1.msra.mxu0 %v565
    %806 = vmatprep.subr.mxu0 %v568
    %807 = vmatpush1.msra.mxu0 %v567
    %808 = vmatprep.subr.mxu0 %v570
    %809 = vmatpush1.msra.mxu0 %v569
    %810 = vmatprep.subr.mxu0 %v572
    %811 = vmatpush1.msra.mxu0 %v571
    %812 = vmatprep.subr.mxu0 %v574
    %813 = vmatpush1.msra.mxu0 %v573
    %814 = vmatprep.subr.mxu0 %v576
    %815 = vmatpush1.msra.mxu0 %v575
    %816 = vmatprep.subr.mxu0 %v578
    %817 = vmatpush1.msra.mxu0 %v577
    %818 = vmatprep.subr.mxu0 %v580
    %819 = vmatpush1.msra.mxu0 %v579
    %820 = vmatprep.subr.mxu0 %v582
    %821 = vmatpush1.msra.mxu0 %v581
    %822 = vmatprep.subr.mxu0 %v584
    %823 = vmatpush1.msra.mxu0 %v583
    %824 = vmatprep.subr.mxu0 %v586
    %825 = vmatpush1.msra.mxu0 %v585
    %826 = vmatprep.subr.mxu0 %v588
    %827 = vmatpush1.msra.mxu0 %v587
    %828 = vmatprep.subr.mxu0 %v590
    %829 = vmatpush1.msra.mxu0 %v589
    %830 = vmatprep.subr.mxu0 %v592
    %831 = vmatpush1.msra.mxu0 %v591
    %832 = vmatprep.subr.mxu0 %v594
    %833 = vmatpush1.msra.mxu0 %v593
    %834 = vmatprep.subr.mxu0 %v596
    %835 = vmatpush1.msra.mxu0 %v595
    %836 = vmatprep.subr.mxu0 %v598
    %837 = vmatpush1.msra.mxu0 %v597
    %838 = vmatprep.subr.mxu0 %v600
    %839 = vmatpush1.msra.mxu0 %v599
    %840 = vmatprep.subr.mxu0 %v602
    %841 = vmatpush1.msra.mxu0 %v601
    %842 = vmatprep.subr.mxu0 %v604
    %843 = vmatpush1.msra.mxu0 %v603
    %844 = vmatprep.subr.mxu0 %v606
    %845 = vmatpush1.msra.mxu0 %v605
    %846 = vmatprep.subr.mxu0 %v608
    %847 = vmatpush1.msra.mxu0 %v607
    %848 = vmatprep.subr.mxu0 %v610
    %849 = vmatpush1.msra.mxu0 %v609
    %850 = vmatprep.subr.mxu0 %v612
    %851 = vmatpush1.msra.mxu0 %v611
    %852 = vmatprep.subr.mxu0 %v614
    %853 = vmatpush1.msra.mxu0 %v613
    %854 = vmatprep.mubr.f32.mxu0 %v486
    %855 = vmatmul.mubr.f32.gmra.mrb[0].mxu0 %v485
    %v856 = vpop.f32.mrb[0].mxu0
    %v857 = vadd.f32 %v786, %v856
    %v858 = vpop.f32.mrb[0].mxu0
    %v859 = vadd.f32 %v788, %v858
    %860 = vdwg.mxu0
    %v862 = vlaneseq
    %v863 = vshrl.u32 %v862, 7
    %v864 = vsub.s32 0, %v863
    %v865 = vrot.slane %v107, %v864
    %v866 = vlaneseq
    %v867 = vshrl.u32 %v866, 7
    %v868 = vsub.s32 2, %v867
    %v869 = vrot.slane %v107, %v868
    %v872 = vlaneseq
    %v873 = vshrl.u32 %v872, 7
    %v874 = vsub.s32 0, %v873
    %v875 = vrot.slane %v865, %v874
    %v876 = vlaneseq
    %v877 = vshrl.u32 %v876, 7
    %v878 = vsub.s32 0, %v877
    %v879 = vrot.slane %v869, %v878
    %v880 = vadd.f32 %v857, %v875
    %v881 = vadd.f32 %v859, %v879
    %v882 = vmax.f32 %v880, 0.0
    %v883 = vmax.f32 %v881, 0.0
    %v884 = vld [vmem:[#allocation7] sm:$0xff]
    %v885 = vld [vmem:[#allocation7 + $0x8] sm:$0xff]
    %v886 = vld [vmem:[#allocation7 + $0x10] sm:$0xff]
    %v887 = vld [vmem:[#allocation7 + $0x18] sm:$0xff]
    %v888 = vld [vmem:[#allocation7 + $0x20] sm:$0xff]
    %v889 = vld [vmem:[#allocation7 + $0x28] sm:$0xff]
    %v890 = vld [vmem:[#allocation7 + $0x30] sm:$0xff]
    %v891 = vld [vmem:[#allocation7 + $0x38] sm:$0xff]
    %v892 = vld [vmem:[#allocation7 + $0x40] sm:$0xff]
    %v893 = vld [vmem:[#allocation7 + $0x48] sm:$0xff]
    %v894 = vld [vmem:[#allocation7 + $0x50] sm:$0xff]
    %v895 = vld [vmem:[#allocation7 + $0x58] sm:$0xff]
    %v896 = vld [vmem:[#allocation7 + $0x60] sm:$0xff]
    %v897 = vld [vmem:[#allocation7 + $0x68] sm:$0xff]
    %v898 = vld [vmem:[#allocation7 + $0x70] sm:$0xff]
    %v899 = vld [vmem:[#allocation7 + $0x78] sm:$0xff]
    %v900 = vld [vmem:[#allocation7 + $0x80] sm:$0xff]
    %v901 = vld [vmem:[#allocation7 + $0x88] sm:$0xff]
    %v902 = vld [vmem:[#allocation7 + $0x90] sm:$0xff]
    %v903 = vld [vmem:[#allocation7 + $0x98] sm:$0xff]
    %v904 = vld [vmem:[#allocation7 + $0xa0] sm:$0xff]
    %v905 = vld [vmem:[#allocation7 + $0xa8] sm:$0xff]
    %v906 = vld [vmem:[#allocation7 + $0xb0] sm:$0xff]
    %v907 = vld [vmem:[#allocation7 + $0xb8] sm:$0xff]
    %v908 = vld [vmem:[#allocation7 + $0xc0] sm:$0xff]
    %v909 = vld [vmem:[#allocation7 + $0xc8] sm:$0xff]
    %v910 = vld [vmem:[#allocation7 + $0xd0] sm:$0xff]
    %v911 = vld [vmem:[#allocation7 + $0xd8] sm:$0xff]
    %v912 = vld [vmem:[#allocation7 + $0xe0] sm:$0xff]
    %v913 = vld [vmem:[#allocation7 + $0xe8] sm:$0xff]
    %v914 = vld [vmem:[#allocation7 + $0xf0] sm:$0xff]
    %v915 = vld [vmem:[#allocation7 + $0xf8] sm:$0xff]
    %v916 = vlaneseq
    %v917 = vshrl.u32 %v916, 7
    %v918 = vsub.s32 1, %v917
    %v919 = vrot.slane %v107, %v918
    %920 = vmatprep.subr.mxu0 0.0
    %921 = vmatpush1.msra.mxu0 %v884
    %922 = vmatprep.subr.mxu0 0.0
    %923 = vmatpush1.msra.mxu0 %v885
    %924 = vmatprep.subr.mxu0 0.0
    %925 = vmatpush1.msra.mxu0 %v886
    %926 = vmatprep.subr.mxu0 0.0
    %927 = vmatpush1.msra.mxu0 %v887
    %928 = vmatprep.subr.mxu0 0.0
    %929 = vmatpush1.msra.mxu0 %v888
    %930 = vmatprep.subr.mxu0 0.0
    %931 = vmatpush1.msra.mxu0 %v889
    %932 = vmatprep.subr.mxu0 0.0
    %933 = vmatpush1.msra.mxu0 %v890
    %934 = vmatprep.subr.mxu0 0.0
    %935 = vmatpush1.msra.mxu0 %v891
    %936 = vmatprep.subr.mxu0 0.0
    %937 = vmatpush1.msra.mxu0 %v892
    %938 = vmatprep.subr.mxu0 0.0
    %939 = vmatpush1.msra.mxu0 %v893
    %940 = vmatprep.subr.mxu0 0.0
    %941 = vmatpush1.msra.mxu0 %v894
    %942 = vmatprep.subr.mxu0 0.0
    %943 = vmatpush1.msra.mxu0 %v895
    %944 = vmatprep.subr.mxu0 0.0
    %945 = vmatpush1.msra.mxu0 %v896
    %946 = vmatprep.subr.mxu0 0.0
    %947 = vmatpush1.msra.mxu0 %v897
    %948 = vmatprep.subr.mxu0 0.0
    %949 = vmatpush1.msra.mxu0 %v898
    %950 = vmatprep.subr.mxu0 0.0
    %951 = vmatpush1.msra.mxu0 %v899
    %952 = vmatprep.subr.mxu0 0.0
    %953 = vmatpush1.msra.mxu0 %v900
    %954 = vmatprep.subr.mxu0 0.0
    %955 = vmatpush1.msra.mxu0 %v901
    %956 = vmatprep.subr.mxu0 0.0
    %957 = vmatpush1.msra.mxu0 %v902
    %958 = vmatprep.subr.mxu0 0.0
    %959 = vmatpush1.msra.mxu0 %v903
    %960 = vmatprep.subr.mxu0 0.0
    %961 = vmatpush1.msra.mxu0 %v904
    %962 = vmatprep.subr.mxu0 0.0
    %963 = vmatpush1.msra.mxu0 %v905
    %964 = vmatprep.subr.mxu0 0.0
    %965 = vmatpush1.msra.mxu0 %v906
    %966 = vmatprep.subr.mxu0 0.0
    %967 = vmatpush1.msra.mxu0 %v907
    %968 = vmatprep.subr.mxu0 0.0
    %969 = vmatpush1.msra.mxu0 %v908
    %970 = vmatprep.subr.mxu0 0.0
    %971 = vmatpush1.msra.mxu0 %v909
    %972 = vmatprep.subr.mxu0 0.0
    %973 = vmatpush1.msra.mxu0 %v910
    %974 = vmatprep.subr.mxu0 0.0
    %975 = vmatpush1.msra.mxu0 %v911
    %976 = vmatprep.subr.mxu0 0.0
    %977 = vmatpush1.msra.mxu0 %v912
    %978 = vmatprep.subr.mxu0 0.0
    %979 = vmatpush1.msra.mxu0 %v913
    %980 = vmatprep.subr.mxu0 0.0
    %981 = vmatpush1.msra.mxu0 %v914
    %982 = vmatprep.subr.mxu0 0.0
    %983 = vmatpush1.msra.mxu0 %v915
    %984 = vmatprep.mubr.f32.mxu0 %v883
    %985 = vmatmul.mubr.f32.gmra.mrb[0].mxu0 %v882
    %v986 = vpop.f32.mrb[0].mxu0
    %v987 = vadd.f32 %v919, %v986
    %v988 = vpop.f32.mrb[0].mxu0
    %989 = vdwg.mxu0
    %990 = vst [vmem:[%s8] sm:$0xff] %v987
    // Predicated region
    $region58: #{critic_forward.1} parent=1 // pred_check
      _
    $region59: #{critic_forward.1} parent=1 // pred_check_branch
      %992 = sbr.rel (0) target = $region61
    $region60: #{critic_forward.1} parent=1 // pred_region
      _
    $region61: #{critic_forward.1} parent=1 // pred_fallthru
      _
    // Predicated region
    $region62: #{critic_forward.1} parent=1 // pred_check
      _
    $region63: #{critic_forward.1} parent=1 // pred_check_branch
      %994 = sbr.rel (0) target = $region65
    $region64: #{critic_forward.1} parent=1 // pred_region
      _
    $region65: #{critic_forward.1} parent=1 // pred_fallthru
      _
    %995 = vsyncpa [#allocation3], 1
    %996 = vsyncpa [#allocation5], 1
    %997 = vsyncpa [#allocation8], 1
    %998 = vsyncpa [#allocation11], 1

</llo_original>
